<compile_context>
chip_gen: v5e
topology: v5e:2x2
jax: 0.10.0
libtpu: 0.0.40
codegen_flags: <defaults>
</compile_context>

<pallas_src>
import functools

import jax
import jax.numpy as jnp
from jax.experimental import pallas as pl
from jax.experimental.pallas import tpu as pltpu


# ----------------------------------------------------------------------------
# Deterministic parameter construction (mirrors _build_adapter + kaiming init)
# ----------------------------------------------------------------------------
def _kaiming_normal_fan_out(key, out_features, in_features, dtype=jnp.float32):
    # nn.init.kaiming_normal_(w, mode='fan_out', nonlinearity='relu')
    # gain = sqrt(2), fan_out = out_features  ->  std = sqrt(2 / out_features)
    std = (2.0 / out_features) ** 0.5
    return (jax.random.normal(key, (out_features, in_features)) * std).astype(dtype)


def _make_linear(key, in_f, out_f, dtype=jnp.float32):
    w = _kaiming_normal_fan_out(key, out_f, in_f, dtype)   # (out, in), PyTorch layout
    b = jnp.zeros((out_f,), dtype)                          # nn.init.constant_(bias, 0)
    return {"w": w, "b": b}


def build_adapter(key, d_model, n_layers, l_start, l_end, mid_dim, dtype=jnp.float32):
    """Python list of length n_layers+1; entries outside [l_start, l_end] are None.

    When mid_dim == d_model (always true for the shared adapter) the entry is
    only a Linear(d, mid)+ReLU and its "up" slot is None.
    """
    adapter = [None] * (n_layers + 1)
    for i in range(l_start, l_end + 1):
        kd, ku = jax.random.split(jax.random.fold_in(key, i))
        if mid_dim == d_model:
            adapter[i] = {"down": _make_linear(kd, d_model, mid_dim, dtype), "up": None}
        else:
            adapter[i] = {
                "down": _make_linear(kd, d_model, mid_dim, dtype),
                "up": _make_linear(ku, mid_dim, d_model, dtype),
            }
    return adapter


# ----------------------------------------------------------------------------
# Pallas kernels: fused adapter bottleneck
# ----------------------------------------------------------------------------
def _adapter_kernel(x_ref, wd_ref, bd_ref, ws_ref, bs_ref, wu_ref, bu_ref, o_ref):
    # down -> relu -> shared -> relu -> up (scale folded into wu/bu by prep).
    # Matmul operands stay in their native dtype; accumulate + epilogue in f32.
    h = jnp.dot(x_ref[...], wd_ref[...],
                preferred_element_type=jnp.float32) + bd_ref[...]
    h = jnp.maximum(h, 0.0)
    h = jnp.dot(h.astype(ws_ref.dtype), ws_ref[...],
                preferred_element_type=jnp.float32) + bs_ref[...]
    h = jnp.maximum(h, 0.0)
    y = jnp.dot(h.astype(wu_ref.dtype), wu_ref[...],
                preferred_element_type=jnp.float32) + bu_ref[...]
    o_ref[...] = y.astype(o_ref.dtype)


def _adapter_noup_kernel(x_ref, wd_ref, bd_ref, ws_ref, bs_ref, o_ref, *, scale):
    # mid_dim == d_model case: adapter is Linear+ReLU only (no up projection).
    # scale is folded into ws/bs by prep when scale >= 0 (then scale == 1.0
    # here and the multiply is elided at trace time).
    h = jnp.dot(x_ref[...], wd_ref[...],
                preferred_element_type=jnp.float32) + bd_ref[...]
    h = jnp.maximum(h, 0.0)
    h = jnp.dot(h.astype(ws_ref.dtype), ws_ref[...],
                preferred_element_type=jnp.float32) + bs_ref[...]
    h = jnp.maximum(h, 0.0)
    if scale != 1.0:
        h = h * scale
    o_ref[...] = h.astype(o_ref.dtype)


# ----------------------------------------------------------------------------
# Generation-aware tiling / VMEM budgeting
# ----------------------------------------------------------------------------
def _round_up(x, m):
    return ((x + m - 1) // m) * m


@functools.lru_cache(maxsize=1)
def _vmem_capacity_bytes():
    try:
        return int(pltpu.get_tpu_info().vmem_capacity_bytes)
    except Exception:
        return 64 * 1024 * 1024   # conservative default = v7x per-TC VMEM


def _vmem_limit_bytes():
    cap = _vmem_capacity_bytes()
    # 128 MiB parts (v5e/v6e): 64 MiB scoped; 64 MiB parts (v7x): 40 MiB.
    return (64 << 20) if cap >= (100 << 20) else (40 << 20)


def _pick_tn(n_rows, d_in, d_out, mid, in_itemsize, out_itemsize, tn_request):
    cap = _vmem_capacity_bytes()
    if cap >= (100 << 20):          # v5e / v6e: 128 MiB VMEM
        stream_budget = 40 << 20
        tn_max = 1024
    else:                           # v7x: 64 MiB VMEM per TensorCore
        stream_budget = 20 << 20
        tn_max = 512

    # Resident, single-buffered weights/biases come out of the budget.
    weight_bytes = ((d_in * mid + mid * mid + mid * d_out) * in_itemsize
                    + (2 * mid + d_out) * 4)
    avail = max(stream_budget - weight_bytes, 1 << 20)

    # Per-row footprint: double-buffered x/out streams, f32 intermediates
    # (two h tiles + the pre-cast y tile), and the cast temporaries of h.
    per_row = (2 * d_in * in_itemsize + 2 * d_out * out_itemsize
               + 4 * (2 * mid + d_out)
               + in_itemsize * (mid + d_out))
    cap_rows = max(8, avail // per_row)

    # dtype-aware sublane granule: 8 for 4-byte, 16 for 2-byte, 32 for 1-byte.
    sub = max(8, 32 // min(in_itemsize, out_itemsize))

    tn = min(int(tn_request), tn_max, int(cap_rows))
    # Keep >= 2 grid steps so both of v7x's TensorCores get work (harmless on
    # single-TC v5e/v6e: one extra ~0.35 us grid step).
    if n_rows > sub:
        tn = min(tn, _round_up(pl.cdiv(n_rows, 2), sub))
    tn = min(tn, _round_up(n_rows, sub))
    if tn >= 128:
        tn = (tn // 128) * 128      # full-M MXU tiles
    else:
        tn = max(sub, (tn // sub) * sub)
    return tn


# ----------------------------------------------------------------------------
# One-time weight prep (hoisted out of the hot path; cached per layer)
# ----------------------------------------------------------------------------
def prepare_adapter(adapter_params, shared_params, scale, compute_dtype=None):
    """Transpose to lane-dense (in, out), cast to the matmul dtype, and fold
    adapter_scale into the last projection. Call once per layer; reuse."""
    wd, bd = adapter_params["down"]["w"], adapter_params["down"]["b"]  # (mid, d_in)
    ws, bs = shared_params["down"]["w"], shared_params["down"]["b"]    # (mid, mid)
    if compute_dtype is None:
        compute_dtype = wd.dtype
    compute_dtype = jnp.dtype(compute_dtype)
    scale = float(scale)
    has_up = adapter_params.get("up") is not None

    prep = {
        "has_up": has_up,
        "d_in": int(wd.shape[1]),
        "mid": int(wd.shape[0]),
        "compute_dtype": compute_dtype,
        "wd_t": wd.T.astype(compute_dtype),
        "bd": bd.reshape(1, -1).astype(jnp.float32),
        "scale": 1.0,
    }
    if has_up:
        wu, bu = adapter_params["up"]["w"], adapter_params["up"]["b"]  # (d_out, mid)
        prep["d_out"] = int(wu.shape[0])
        prep["ws_t"] = ws.T.astype(compute_dtype)
        prep["bs"] = bs.reshape(1, -1).astype(jnp.float32)
        prep["wu_t"] = (wu.T.astype(jnp.float32) * scale).astype(compute_dtype)
        prep["bu"] = (bu.astype(jnp.float32) * scale).reshape(1, -1)
    else:
        prep["d_out"] = prep["mid"]
        if scale >= 0.0:
            # relu(s*z) == s*relu(z) for s >= 0: fold scale into the shared layer.
            prep["ws_t"] = (ws.T.astype(jnp.float32) * scale).astype(compute_dtype)
            prep["bs"] = (bs.astype(jnp.float32) * scale).reshape(1, -1)
        else:
            prep["ws_t"] = ws.T.astype(compute_dtype)
            prep["bs"] = bs.reshape(1, -1).astype(jnp.float32)
            prep["scale"] = scale
    return prep


# ----------------------------------------------------------------------------
# Hot-path wrapper
# ----------------------------------------------------------------------------
def apply_adapter_prepared(x, prep, *, tn=512):
    """Apply one layer's adapter to x: [N, d_model] using prepared weights."""
    N, d_in = x.shape
    assert d_in == prep["d_in"], (d_in, prep["d_in"])
    mid, d_out = prep["mid"], prep["d_out"]
    compute_dtype = prep["compute_dtype"]
    out_dtype = x.dtype
    # TODO(synk): ideally the caller already supplies x in compute_dtype (e.g.
    # bf16) so this cast is a no-op and x streams at half the HBM traffic.
    x_in = x if x.dtype == compute_dtype else x.astype(compute_dtype)

    tn_eff = _pick_tn(N, d_in, d_out, mid,
                      jnp.dtype(compute_dtype).itemsize,
                      jnp.dtype(out_dtype).itemsize,
                      tn)
    grid = (pl.cdiv(N, tn_eff),)

    # No row/lane padding: block last dims equal the full feature dims, and
    # Pallas clips the edge block's reads/writes along the row axis (rows are
    # independent, so stale edge-block data never reaches a valid output row).
    x_spec = pl.BlockSpec((tn_eff, d_in), lambda i: (i, 0))
    o_spec = pl.BlockSpec((tn_eff, d_out), lambda i: (i, 0))

    def w_spec(shape):
        # Resident across the grid -> single-buffered (saves VMEM for big tn).
        return pl.BlockSpec(shape, lambda i: (0, 0), pipeline_mode=pl.Buffered(1))

    cparams = pltpu.CompilerParams(
        dimension_semantics=("parallel",),          # megacore-shard the row grid
        vmem_limit_bytes=_vmem_limit_bytes(),       # generation-aware scoped limit
    )

    if prep["has_up"]:
        out = pl.pallas_call(
            _adapter_kernel,
            out_shape=jax.ShapeDtypeStruct((N, d_out), out_dtype),
            grid_spec=pltpu.PrefetchScalarGridSpec(
                num_scalar_prefetch=0,
                grid=grid,
                in_specs=[
                    x_spec,
                    w_spec((d_in, mid)), w_spec((1, mid)),
                    w_spec((mid, mid)), w_spec((1, mid)),
                    w_spec((mid, d_out)), w_spec((1, d_out)),
                ],
                out_specs=o_spec),
            compiler_params=cparams,
        )(x_in, prep["wd_t"], prep["bd"], prep["ws_t"], prep["bs"],
          prep["wu_t"], prep["bu"])
    else:
        kernel = functools.partial(_adapter_noup_kernel, scale=float(prep["scale"]))
        out = pl.pallas_call(
            kernel,
            out_shape=jax.ShapeDtypeStruct((N, d_out), out_dtype),
            grid_spec=pltpu.PrefetchScalarGridSpec(
                num_scalar_prefetch=0,
                grid=grid,
                in_specs=[
                    x_spec,
                    w_spec((d_in, mid)), w_spec((1, mid)),
                    w_spec((mid, mid)), w_spec((1, mid)),
                ],
                out_specs=o_spec),
            compiler_params=cparams,
        )(x_in, prep["wd_t"], prep["bd"], prep["ws_t"], prep["bs"])

    return out


def apply_adapter(x, adapter_params, shared_params, scale, *,
                  compute_dtype=None, tn=512):
    """Convenience path (does weight prep per call; prefer the cached prep)."""
    prep = prepare_adapter(adapter_params, shared_params, scale,
                           compute_dtype=compute_dtype)
    return apply_adapter_prepared(x, prep, tn=tn)


# ----------------------------------------------------------------------------
# JAX mirror of the PyTorch AdapterLearner (parameters + closures + prep cache)
# ----------------------------------------------------------------------------
class AdapterLearner:
    def __init__(self, key, *, text_d_model, vis_d_model, n_layers,
                 l_start, l_end, mid_dim, scale, dtype=jnp.float32):
        kt, kv, ks = jax.random.split(key, 3)
        self.text_adapter = build_adapter(kt, text_d_model, n_layers, l_start, l_end, mid_dim, dtype)
        self.visual_adapter = build_adapter(kv, vis_d_model, n_layers, l_start, l_end, mid_dim, dtype)
        # shared adapter: d_model == mid_dim, so only its "down" entry exists.
        self.shared_adapter = build_adapter(ks, mid_dim, n_layers, l_start, l_end, mid_dim, dtype)
        self.adapter_scale = float(scale)
        self.dtype = dtype
        self._prep_cache = {}

    # --- original module interface ---
    def return_text_adapter(self, index):
        return (self.text_adapter[index], self.shared_adapter[index], self.adapter_scale)

    def return_visual_adapter(self, index):
        return (self.visual_adapter[index], self.shared_adapter[index], self.adapter_scale)

    def forward(self):
        text_adapter_func = lambda x: self.return_text_adapter(index=x)
        visual_adapter_func = lambda x: self.return_visual_adapter(index=x)
        return (text_adapter_func, visual_adapter_func)

    # --- hot-path helpers: per-layer weight prep hoisted & cached once ---
    def prepared_text_adapter(self, index, compute_dtype=None):
        return self._prepared("text", index, compute_dtype)

    def prepared_visual_adapter(self, index, compute_dtype=None):
        return self._prepared("visual", index, compute_dtype)

    def prepared_shared_adapter(self, index, compute_dtype=None):
        return self._prepared("shared", index, compute_dtype)

    def _prepared(self, kind, index, compute_dtype):
        cd = jnp.dtype(self.dtype if compute_dtype is None else compute_dtype)
        key = (kind, index, cd.name)
        if key not in self._prep_cache:
            adapters = {"text": self.text_adapter,
                        "visual": self.visual_adapter,
                        "shared": self.shared_adapter}[kind]
            self._prep_cache[key] = prepare_adapter(
                adapters[index], self.shared_adapter[index], self.adapter_scale,
                compute_dtype=cd)
        return self._prep_cache[key]


# ----------------------------------------------------------------------------
# Pure-JAX reference
# ----------------------------------------------------------------------------
def _apply_adapter_ref(x, adapter_params, shared_params, scale):
    wd, bd = adapter_params["down"]["w"], adapter_params["down"]["b"]
    ws, bs = shared_params["down"]["w"], shared_params["down"]["b"]
    h = jnp.maximum(x @ wd.T + bd, 0.0)
    h = jnp.maximum(h @ ws.T + bs, 0.0)
    up = adapter_params.get("up")
    if up is None:
        return scale * h
    return scale * (h @ up["w"].T + up["b"])


# ----------------------------------------------------------------------------
if __name__ == "__main__":
    key = jax.random.PRNGKey(0)
    kp, kx_t, kx_v, kx_m = jax.random.split(key, 4)

    # Small synthetic config consistent with the module's __init__:
    #   ADAPTER_START=1, ADAPTER_END=3, ADAPTER_DIM=16, ADAPTER_SCALE=0.5
    TEXT_D, VIS_D, MID_DIM, N_LAYERS = 32, 64, 16, 4
    L_START, L_END, SCALE = 1, 3, 0.5
    N_TOKENS = 200   # deliberately NOT a multiple of the tile / of 8

    learner = AdapterLearner(
        kp,
        text_d_model=TEXT_D, vis_d_model=VIS_D, n_layers=N_LAYERS,
        l_start=L_START, l_end=L_END, mid_dim=MID_DIM, scale=SCALE,
        dtype=jnp.float32,
    )

    # forward() returns the two closures, exactly like the PyTorch module.
    text_adapter_func, visual_adapter_func = learner.forward()

    layer = 2
    text_ad, text_shared, text_scale = text_adapter_func(layer)
    vis_ad, vis_shared, vis_scale = visual_adapter_func(layer)

    x_text = jax.random.normal(kx_t, (N_TOKENS, TEXT_D), jnp.float32)
    x_vis = jax.random.normal(kx_v, (N_TOKENS, VIS_D), jnp.float32)
    x_mid = jax.random.normal(kx_m, (N_TOKENS, MID_DIM), jnp.float32)

    # Hot path: prepared (pre-transposed / scale-folded) weights, cached per layer.
    prep_text = learner.prepared_text_adapter(layer)
    prep_vis = learner.prepared_visual_adapter(layer)
    prep_mid = learner.prepared_shared_adapter(layer)   # mid_dim==d_model, "up" is None

    y_text = apply_adapter_prepared(x_text, prep_text)
    y_vis = apply_adapter_prepared(x_vis, prep_vis)
    y_mid = apply_adapter_prepared(x_mid, prep_mid)
    jax.block_until_ready((y_text, y_vis, y_mid))

    # bf16 activation-streaming path (halves x/out HBM traffic; f32 epilogue).
    prep_text_bf16 = learner.prepared_text_adapter(layer, compute_dtype=jnp.bfloat16)
    x_text_bf16 = x_text.astype(jnp.bfloat16)
    y_text_bf16 = apply_adapter_prepared(x_text_bf16, prep_text_bf16)
    jax.block_until_ready(y_text_bf16)

    # Correctness vs. pure-JAX reference.
    ref_text = _apply_adapter_ref(x_text, text_ad, text_shared, text_scale)
    ref_vis = _apply_adapter_ref(x_vis, vis_ad, vis_shared, vis_scale)
    ref_mid = _apply_adapter_ref(x_mid, text_shared, text_shared, text_scale)
    assert y_text.shape == (N_TOKENS, TEXT_D) and y_vis.shape == (N_TOKENS, VIS_D)
    assert y_mid.shape == (N_TOKENS, MID_DIM)
    assert jnp.allclose(y_text, ref_text, atol=1e-4, rtol=1e-4)
    assert jnp.allclose(y_vis, ref_vis, atol=1e-4, rtol=1e-4)
    assert jnp.allclose(y_mid, ref_mid, atol=1e-4, rtol=1e-4)
    assert jnp.allclose(y_text_bf16.astype(jnp.float32), ref_text, atol=5e-2, rtol=5e-2)

    print("KERNEL_OK")
</pallas_src>

<mosaic_0001>
module attributes {stable_mosaic.version = 11 : i64} {
  func.func @_adapter_kernel(%arg0: i32, %arg1: memref<104x32xf32, #tpu.memory_space<vmem>>, %arg2: memref<32x16xf32, #tpu.memory_space<vmem>>, %arg3: memref<1x16xf32, #tpu.memory_space<vmem>>, %arg4: memref<16x16xf32, #tpu.memory_space<vmem>>, %arg5: memref<1x16xf32, #tpu.memory_space<vmem>>, %arg6: memref<16x32xf32, #tpu.memory_space<vmem>>, %arg7: memref<1x32xf32, #tpu.memory_space<vmem>>, %arg8: memref<104x32xf32, #tpu.memory_space<vmem>>) attributes {dimension_semantics = [#tpu.dimension_semantics<parallel>], iteration_bounds = array<i64: 2>, scalar_prefetch = 0 : i64, scratch_operands = 0 : i64, tpu.core_type = #tpu.core_type<tc>, window_params = [{transform_indices = @transform_0, window_bounds = array<i64: 104, 32>}, {pipeline_mode = #tpu.pipeline_mode<synchronous>, transform_indices = @transform_1, window_bounds = array<i64: 32, 16>}, {pipeline_mode = #tpu.pipeline_mode<synchronous>, transform_indices = @transform_2, window_bounds = array<i64: 1, 16>}, {pipeline_mode = #tpu.pipeline_mode<synchronous>, transform_indices = @transform_3, window_bounds = array<i64: 16, 16>}, {pipeline_mode = #tpu.pipeline_mode<synchronous>, transform_indices = @transform_4, window_bounds = array<i64: 1, 16>}, {pipeline_mode = #tpu.pipeline_mode<synchronous>, transform_indices = @transform_5, window_bounds = array<i64: 16, 32>}, {pipeline_mode = #tpu.pipeline_mode<synchronous>, transform_indices = @transform_6, window_bounds = array<i64: 1, 32>}, {transform_indices = @transform_7, window_bounds = array<i64: 104, 32>}]} {
    %c0 = arith.constant 0 : index
    %c0_0 = arith.constant 0 : index
    %0 = vector.load %arg1[%c0, %c0_0] : memref<104x32xf32, #tpu.memory_space<vmem>>, vector<104x32xf32>
    %c0_1 = arith.constant 0 : index
    %c0_2 = arith.constant 0 : index
    %1 = vector.load %arg2[%c0_1, %c0_2] : memref<32x16xf32, #tpu.memory_space<vmem>>, vector<32x16xf32>
    %cst = arith.constant dense<0.000000e+00> : vector<104x16xf32>
    %2 = tpu.matmul %0, %1, %cst {dimension_numbers = #tpu.dot_dimension_numbers<[1], [0], [0], [1], [0, 0, 1, 1], [], []>} : vector<104x32xf32>, vector<32x16xf32>, vector<104x16xf32> -> vector<104x16xf32>
    %c0_3 = arith.constant 0 : index
    %c0_4 = arith.constant 0 : index
    %3 = vector.load %arg3[%c0_3, %c0_4] : memref<1x16xf32, #tpu.memory_space<vmem>>, vector<1x16xf32>
    %4 = vector.broadcast %3 : vector<1x16xf32> to vector<104x16xf32>
    %5 = arith.addf %2, %4 : vector<104x16xf32>
    %cst_5 = arith.constant 0.000000e+00 : f32
    %6 = vector.broadcast %cst_5 : f32 to vector<104x16xf32>
    %7 = arith.maximumf %5, %6 : vector<104x16xf32>
    %c0_6 = arith.constant 0 : index
    %c0_7 = arith.constant 0 : index
    %8 = vector.load %arg4[%c0_6, %c0_7] : memref<16x16xf32, #tpu.memory_space<vmem>>, vector<16x16xf32>
    %cst_8 = arith.constant dense<0.000000e+00> : vector<104x16xf32>
    %9 = tpu.matmul %7, %8, %cst_8 {dimension_numbers = #tpu.dot_dimension_numbers<[1], [0], [0], [1], [0, 0, 1, 1], [], []>} : vector<104x16xf32>, vector<16x16xf32>, vector<104x16xf32> -> vector<104x16xf32>
    %c0_9 = arith.constant 0 : index
    %c0_10 = arith.constant 0 : index
    %10 = vector.load %arg5[%c0_9, %c0_10] : memref<1x16xf32, #tpu.memory_space<vmem>>, vector<1x16xf32>
    %11 = vector.broadcast %10 : vector<1x16xf32> to vector<104x16xf32>
    %12 = arith.addf %9, %11 : vector<104x16xf32>
    %cst_11 = arith.constant 0.000000e+00 : f32
    %13 = vector.broadcast %cst_11 : f32 to vector<104x16xf32>
    %14 = arith.maximumf %12, %13 : vector<104x16xf32>
    %c0_12 = arith.constant 0 : index
    %c0_13 = arith.constant 0 : index
    %15 = vector.load %arg6[%c0_12, %c0_13] : memref<16x32xf32, #tpu.memory_space<vmem>>, vector<16x32xf32>
    %cst_14 = arith.constant dense<0.000000e+00> : vector<104x32xf32>
    %16 = tpu.matmul %14, %15, %cst_14 {dimension_numbers = #tpu.dot_dimension_numbers<[1], [0], [0], [1], [0, 0, 1, 1], [], []>} : vector<104x16xf32>, vector<16x32xf32>, vector<104x32xf32> -> vector<104x32xf32>
    %c0_15 = arith.constant 0 : index
    %c0_16 = arith.constant 0 : index
    %17 = vector.load %arg7[%c0_15, %c0_16] : memref<1x32xf32, #tpu.memory_space<vmem>>, vector<1x32xf32>
    %18 = vector.broadcast %17 : vector<1x32xf32> to vector<104x32xf32>
    %19 = arith.addf %16, %18 : vector<104x32xf32>
    %c0_17 = arith.constant 0 : index
    %c0_18 = arith.constant 0 : index
    %20 = vector.load %arg8[%c0_17, %c0_18] : memref<104x32xf32, #tpu.memory_space<vmem>>, vector<104x32xf32>
    tpu.vector_store %arg8[%c0_17, %c0_18], %19 {strides = array<i32>} : memref<104x32xf32, #tpu.memory_space<vmem>>, vector<104x32xf32>,
    return
  }
  func.func @transform_0(%arg0: i32) -> (i32, i32) {
    %c0_i32 = arith.constant 0 : i32
    %c0_i32_0 = arith.constant 0 : i32
    return %arg0, %c0_i32 : i32, i32
  }
  func.func @transform_1(%arg0: i32) -> (i32, i32) {
    %c0_i32 = arith.constant 0 : i32
    %c0_i32_0 = arith.constant 0 : i32
    %c0_i32_1 = arith.constant 0 : i32
    return %c0_i32, %c0_i32_0 : i32, i32
  }
  func.func @transform_2(%arg0: i32) -> (i32, i32) {
    %c0_i32 = arith.constant 0 : i32
    %c0_i32_0 = arith.constant 0 : i32
    %c0_i32_1 = arith.constant 0 : i32
    return %c0_i32, %c0_i32_0 : i32, i32
  }
  func.func @transform_3(%arg0: i32) -> (i32, i32) {
    %c0_i32 = arith.constant 0 : i32
    %c0_i32_0 = arith.constant 0 : i32
    %c0_i32_1 = arith.constant 0 : i32
    return %c0_i32, %c0_i32_0 : i32, i32
  }
  func.func @transform_4(%arg0: i32) -> (i32, i32) {
    %c0_i32 = arith.constant 0 : i32
    %c0_i32_0 = arith.constant 0 : i32
    %c0_i32_1 = arith.constant 0 : i32
    return %c0_i32, %c0_i32_0 : i32, i32
  }
  func.func @transform_5(%arg0: i32) -> (i32, i32) {
    %c0_i32 = arith.constant 0 : i32
    %c0_i32_0 = arith.constant 0 : i32
    %c0_i32_1 = arith.constant 0 : i32
    return %c0_i32, %c0_i32_0 : i32, i32
  }
  func.func @transform_6(%arg0: i32) -> (i32, i32) {
    %c0_i32 = arith.constant 0 : i32
    %c0_i32_0 = arith.constant 0 : i32
    %c0_i32_1 = arith.constant 0 : i32
    return %c0_i32, %c0_i32_0 : i32, i32
  }
  func.func @transform_7(%arg0: i32) -> (i32, i32) {
    %c0_i32 = arith.constant 0 : i32
    %c0_i32_0 = arith.constant 0 : i32
    return %arg0, %c0_i32 : i32, i32
  }
}

</mosaic_0001>

<llo_original>
// kernel: tpu_custom_call.1
$region0: #{tpu_custom_call.1}
  #allocation0 [shape = 'u32[]', space=smem, size = 0x4, offset = 0x4, fixed_abs, tag = 'smem constant byte address 0x4 - core index']
  #allocation1 [shape = 'u32[72,128]{1,0:T(1,128)}', space=vmem, size = 0x9000, scoped, tag = 'internal scratch']
  %s0 = inlined_call_operand.vmem [shape: f32[200,32], index: 0, kind: input, shape index: {}]
  %s1 = inlined_call_operand.vmem [shape: f32[32,16], index: 1, kind: input, shape index: {}]
  %s2 = inlined_call_operand.vmem [shape: f32[1,16], index: 2, kind: input, shape index: {}]
  %s3 = inlined_call_operand.vmem [shape: f32[16,16], index: 3, kind: input, shape index: {}]
  %s4 = inlined_call_operand.vmem [shape: f32[1,16], index: 4, kind: input, shape index: {}]
  %s5 = inlined_call_operand.vmem [shape: f32[16,32], index: 5, kind: input, shape index: {}]
  %s6 = inlined_call_operand.vmem [shape: f32[1,32], index: 6, kind: input, shape index: {}]
  %s7 = inlined_call_operand.vmem [shape: f32[200,32], index: 7, kind: output, shape index: {}]
  %s8 = sld [smem:[#allocation0]]
  $region109: #{tpu_custom_call.1} parent=0
    _
  %s10 = ssub.s32 1, %s8
  %s11 = scalar_select 0, %s10, %s8
  $region1: #{tpu_custom_call.1} parent=0
    #allocation2 [shape = 'u8[106496]{0}', space=vmem, size = 0x1a000, scoped, tag = 'output window, operand 0']
    loop: start=0, step=1, limit=4
    $region2: #{tpu_custom_call.1} parent=1 // loop_pre_header
      _
    $region3: #{tpu_custom_call.1} parent=1 // loop_header
      %s13 = sphi 0, %s17
      %p14 = scmp.ge.s32.totalorder %s13, 4
      %s23 = sphi 0, %s25
      %s26 = sphi 0, %s23
      %s27 = sphi 0, %s26
      %s43 = sphi 0, %s27
      %s47 = sphi 0, %s47
      %s49 = sphi 0, %s47
      %s50 = sphi 0, %s49
      %s64 = sphi 0, %s50
      %s68 = sphi 0, %s68
      %s70 = sphi 0, %s68
      %s71 = sphi 0, %s70
      %s85 = sphi 0, %s71
      %s89 = sphi 0, %s89
      %s91 = sphi 0, %s89
      %s92 = sphi 0, %s91
      %s106 = sphi 0, %s92
      %s110 = sphi 0, %s110
      %s112 = sphi 0, %s110
      %s113 = sphi 0, %s112
      %s127 = sphi 0, %s113
      %s131 = sphi 0, %s131
      %s133 = sphi 0, %s131
      %s134 = sphi 0, %s133
      %s148 = sphi 0, %s134
      %s152 = sphi 0, %s152
      %s154 = sphi 0, %s152
      %s155 = sphi 0, %s154
      %s169 = sphi 0, %s155
      %s175 = sphi 0, %s177
      %s178 = sphi 0, %s175
      %s179 = sphi 0, %s178
      %s195 = sphi 0, %s179
    $region4: #{tpu_custom_call.1} parent=1 // loop_header_branch
      %16 = sbr.rel (%p14) target = $region8
    $region5: #{tpu_custom_call.1} parent=1 // loop_body
      %s18 = ssub.s32 %s13, 1
      %s19 = ssub.s32 %s13, 2
      %s20 = sadd.s32 %s13, 1
      %s21 = ssub.s32 %s13, %s20
      %p22 = scmp.eq.s32.totalorder %s21, 0
      %s24 = sadd.s32 %s23, 1
      %s25 = scalar_select %p22, %s23, %s24
      %p28 = pneg %p22
      %p29 = scmp.eq.s32.totalorder %s13, 1
      %p30 = por %p28, %p29
      %p31 = scmp.ne.s32.totalorder %s23, %s26
      %p32 = scmp.eq.s32.totalorder %s13, 0
      %p33 = por %p31, %p32
      %p34 = scmp.ne.s32.totalorder %s23, %s26
      %p35 = scmp.eq.s32.totalorder %s18, 1
      %p36 = por %p34, %p35
      %p37 = scmp.ne.s32.totalorder %s26, %s27
      %p38 = scmp.eq.s32.totalorder %s18, 0
      %p39 = por %p37, %p38
      %p40 = scmp.ne.s32.totalorder %s26, %s27
      %p41 = scmp.eq.s32.totalorder %s19, 1
      %p42 = por %p40, %p41
      %p44 = scmp.ne.s32.totalorder %s27, %s43
      %p45 = scmp.eq.s32.totalorder %s19, 0
      %p46 = por %p44, %p45
      %s48 = sadd.s32 %s47, 1
      %p51 = scmp.eq.s32.totalorder %s13, 1
      %p52 = scmp.ne.s32.totalorder %s47, %s49
      %p53 = scmp.eq.s32.totalorder %s13, 0
      %p54 = por %p52, %p53
      %p55 = scmp.ne.s32.totalorder %s47, %s49
      %p56 = scmp.eq.s32.totalorder %s18, 1
      %p57 = por %p55, %p56
      %p58 = scmp.ne.s32.totalorder %s49, %s50
      %p59 = scmp.eq.s32.totalorder %s18, 0
      %p60 = por %p58, %p59
      %p61 = scmp.ne.s32.totalorder %s49, %s50
      %p62 = scmp.eq.s32.totalorder %s19, 1
      %p63 = por %p61, %p62
      %p65 = scmp.ne.s32.totalorder %s50, %s64
      %p66 = scmp.eq.s32.totalorder %s19, 0
      %p67 = por %p65, %p66
      %s69 = sadd.s32 %s68, 1
      %p72 = scmp.eq.s32.totalorder %s13, 1
      %p73 = scmp.ne.s32.totalorder %s68, %s70
      %p74 = scmp.eq.s32.totalorder %s13, 0
      %p75 = por %p73, %p74
      %p76 = scmp.ne.s32.totalorder %s68, %s70
      %p77 = scmp.eq.s32.totalorder %s18, 1
      %p78 = por %p76, %p77
      %p79 = scmp.ne.s32.totalorder %s70, %s71
      %p80 = scmp.eq.s32.totalorder %s18, 0
      %p81 = por %p79, %p80
      %p82 = scmp.ne.s32.totalorder %s70, %s71
      %p83 = scmp.eq.s32.totalorder %s19, 1
      %p84 = por %p82, %p83
      %p86 = scmp.ne.s32.totalorder %s71, %s85
      %p87 = scmp.eq.s32.totalorder %s19, 0
      %p88 = por %p86, %p87
      %s90 = sadd.s32 %s89, 1
      %p93 = scmp.eq.s32.totalorder %s13, 1
      %p94 = scmp.ne.s32.totalorder %s89, %s91
      %p95 = scmp.eq.s32.totalorder %s13, 0
      %p96 = por %p94, %p95
      %p97 = scmp.ne.s32.totalorder %s89, %s91
      %p98 = scmp.eq.s32.totalorder %s18, 1
      %p99 = por %p97, %p98
      %p100 = scmp.ne.s32.totalorder %s91, %s92
      %p101 = scmp.eq.s32.totalorder %s18, 0
      %p102 = por %p100, %p101
      %p103 = scmp.ne.s32.totalorder %s91, %s92
      %p104 = scmp.eq.s32.totalorder %s19, 1
      %p105 = por %p103, %p104
      %p107 = scmp.ne.s32.totalorder %s92, %s106
      %p108 = scmp.eq.s32.totalorder %s19, 0
      %p109 = por %p107, %p108
      %s111 = sadd.s32 %s110, 1
      %p114 = scmp.eq.s32.totalorder %s13, 1
      %p115 = scmp.ne.s32.totalorder %s110, %s112
      %p116 = scmp.eq.s32.totalorder %s13, 0
      %p117 = por %p115, %p116
      %p118 = scmp.ne.s32.totalorder %s110, %s112
      %p119 = scmp.eq.s32.totalorder %s18, 1
      %p120 = por %p118, %p119
      %p121 = scmp.ne.s32.totalorder %s112, %s113
      %p122 = scmp.eq.s32.totalorder %s18, 0
      %p123 = por %p121, %p122
      %p124 = scmp.ne.s32.totalorder %s112, %s113
      %p125 = scmp.eq.s32.totalorder %s19, 1
      %p126 = por %p124, %p125
      %p128 = scmp.ne.s32.totalorder %s113, %s127
      %p129 = scmp.eq.s32.totalorder %s19, 0
      %p130 = por %p128, %p129
      %s132 = sadd.s32 %s131, 1
      %p135 = scmp.eq.s32.totalorder %s13, 1
      %p136 = scmp.ne.s32.totalorder %s131, %s133
      %p137 = scmp.eq.s32.totalorder %s13, 0
      %p138 = por %p136, %p137
      %p139 = scmp.ne.s32.totalorder %s131, %s133
      %p140 = scmp.eq.s32.totalorder %s18, 1
      %p141 = por %p139, %p140
      %p142 = scmp.ne.s32.totalorder %s133, %s134
      %p143 = scmp.eq.s32.totalorder %s18, 0
      %p144 = por %p142, %p143
      %p145 = scmp.ne.s32.totalorder %s133, %s134
      %p146 = scmp.eq.s32.totalorder %s19, 1
      %p147 = por %p145, %p146
      %p149 = scmp.ne.s32.totalorder %s134, %s148
      %p150 = scmp.eq.s32.totalorder %s19, 0
      %p151 = por %p149, %p150
      %s153 = sadd.s32 %s152, 1
      %p156 = scmp.eq.s32.totalorder %s13, 1
      %p157 = scmp.ne.s32.totalorder %s152, %s154
      %p158 = scmp.eq.s32.totalorder %s13, 0
      %p159 = por %p157, %p158
      %p160 = scmp.ne.s32.totalorder %s152, %s154
      %p161 = scmp.eq.s32.totalorder %s18, 1
      %p162 = por %p160, %p161
      %p163 = scmp.ne.s32.totalorder %s154, %s155
      %p164 = scmp.eq.s32.totalorder %s18, 0
      %p165 = por %p163, %p164
      %p166 = scmp.ne.s32.totalorder %s154, %s155
      %p167 = scmp.eq.s32.totalorder %s19, 1
      %p168 = por %p166, %p167
      %p170 = scmp.ne.s32.totalorder %s155, %s169
      %p171 = scmp.eq.s32.totalorder %s19, 0
      %p172 = por %p170, %p171
      %s173 = ssub.s32 %s13, %s20
      %p174 = scmp.eq.s32.totalorder %s173, 0
      %s176 = sadd.s32 %s175, 1
      %s177 = scalar_select %p174, %s175, %s176
      %p180 = pneg %p174
      %p181 = scmp.eq.s32.totalorder %s13, 1
      %p182 = por %p180, %p181
      %p183 = scmp.ne.s32.totalorder %s175, %s178
      %p184 = scmp.eq.s32.totalorder %s13, 0
      %p185 = por %p183, %p184
      %p186 = scmp.ne.s32.totalorder %s175, %s178
      %p187 = scmp.eq.s32.totalorder %s18, 1
      %p188 = por %p186, %p187
      %p189 = scmp.ne.s32.totalorder %s178, %s179
      %p190 = scmp.eq.s32.totalorder %s18, 0
      %p191 = por %p189, %p190
      %p192 = scmp.ne.s32.totalorder %s178, %s179
      %p193 = scmp.eq.s32.totalorder %s19, 1
      %p194 = por %p192, %p193
      %p196 = scmp.ne.s32.totalorder %s179, %s195
      %p197 = scmp.eq.s32.totalorder %s19, 0
      %p198 = por %p196, %p197
      %p199 = scmp.le.s32.totalorder 1, %s13
      %p200 = scmp.lt.s32.totalorder %s13, 3
      %p201 = pnand %p199, %p200
      %p202 = pneg %p201
      // Predicated region
      $region9: #{tpu_custom_call.1} parent=5 // pred_check
        _
      $region10: #{tpu_custom_call.1} parent=5 // pred_check_branch
        %204 = sbr.rel (%p201) target = $region12
      $region11: #{tpu_custom_call.1} parent=5 // pred_region
        %s205 = ssub.s32 %s13, 1
        // Predicated region
        $region13: #{tpu_custom_call.1} parent=11 // pred_check
          %p206 = pneg %p60
        $region14: #{tpu_custom_call.1} parent=11 // pred_check_branch
          %208 = sbr.rel (%p206) target = $region16
        $region15: #{tpu_custom_call.1} parent=11 // pred_region
          _
        $region16: #{tpu_custom_call.1} parent=11 // pred_fallthru
          _
        // Predicated region
        $region17: #{tpu_custom_call.1} parent=11 // pred_check
          %p209 = pneg %p81
        $region18: #{tpu_custom_call.1} parent=11 // pred_check_branch
          %211 = sbr.rel (%p209) target = $region20
        $region19: #{tpu_custom_call.1} parent=11 // pred_region
          _
        $region20: #{tpu_custom_call.1} parent=11 // pred_fallthru
          _
        // Predicated region
        $region21: #{tpu_custom_call.1} parent=11 // pred_check
          %p212 = pneg %p102
        $region22: #{tpu_custom_call.1} parent=11 // pred_check_branch
          %214 = sbr.rel (%p212) target = $region24
        $region23: #{tpu_custom_call.1} parent=11 // pred_region
          _
        $region24: #{tpu_custom_call.1} parent=11 // pred_fallthru
          _
        // Predicated region
        $region25: #{tpu_custom_call.1} parent=11 // pred_check
          %p215 = pneg %p123
        $region26: #{tpu_custom_call.1} parent=11 // pred_check_branch
          %217 = sbr.rel (%p215) target = $region28
        $region27: #{tpu_custom_call.1} parent=11 // pred_region
          _
        $region28: #{tpu_custom_call.1} parent=11 // pred_fallthru
          _
        // Predicated region
        $region29: #{tpu_custom_call.1} parent=11 // pred_check
          %p218 = pneg %p144
        $region30: #{tpu_custom_call.1} parent=11 // pred_check_branch
          %220 = sbr.rel (%p218) target = $region32
        $region31: #{tpu_custom_call.1} parent=11 // pred_region
          _
        $region32: #{tpu_custom_call.1} parent=11 // pred_fallthru
          _
        // Predicated region
        $region33: #{tpu_custom_call.1} parent=11 // pred_check
          %p221 = pneg %p165
        $region34: #{tpu_custom_call.1} parent=11 // pred_check_branch
          %223 = sbr.rel (%p221) target = $region36
        $region35: #{tpu_custom_call.1} parent=11 // pred_region
          _
        $region36: #{tpu_custom_call.1} parent=11 // pred_fallthru
          _
      $region12: #{tpu_custom_call.1} parent=5 // pred_fallthru
        _
      %p224 = scmp.lt.s32.totalorder %s13, 2
      // Predicated region
      $region37: #{tpu_custom_call.1} parent=5 // pred_check
        %p225 = pneg %p224
      $region38: #{tpu_custom_call.1} parent=5 // pred_check_branch
        %227 = sbr.rel (%p225) target = $region40
      $region39: #{tpu_custom_call.1} parent=5 // pred_region
        // Predicated region
        $region41: #{tpu_custom_call.1} parent=39 // pred_check
          %p228 = pneg %p33
        $region42: #{tpu_custom_call.1} parent=39 // pred_check_branch
          %230 = sbr.rel (%p228) target = $region44
        $region43: #{tpu_custom_call.1} parent=39 // pred_region
          %s231 = smul.u32 13, %s13
          %s232 = ssub.s32 25, %s231
          %p233 = scmp.lt.s32.totalorder %s232, 13
          %s234 = scalar_select %p233, %s232, 13
          %s235 = smul.u32 8, %s234
          %p236 = scmp.lt.s32.totalorder %s231, 24
          %s237 = scalar_select %p236, %s231, 24
          %s238 = smul.addr %s237, 8
          %s239 = scalar_lea.vmem %s0, %s238
          %s240 = smul.u32 13, %s13
          %s241 = ssub.s32 25, %s240
          %p242 = scmp.lt.s32.totalorder %s241, 13
          %s243 = scalar_select %p242, %s241, 13
          %s244 = smul.u32 8, %s243
        $region44: #{tpu_custom_call.1} parent=39 // pred_fallthru
          _
      $region40: #{tpu_custom_call.1} parent=5 // pred_fallthru
        _
      %p245 = scmp.le.s32.totalorder 1, %s13
      %p246 = scmp.lt.s32.totalorder %s13, 3
      %p247 = pnand %p245, %p246
      %p248 = pneg %p247
      // Predicated region
      $region45: #{tpu_custom_call.1} parent=5 // pred_check
        _
      $region46: #{tpu_custom_call.1} parent=5 // pred_check_branch
        %250 = sbr.rel (%p247) target = $region48
      $region47: #{tpu_custom_call.1} parent=5 // pred_region
        %s251 = ssub.s32 %s13, 1
        %s252 = smul.u32 13, %s18
        %s253 = ssub.s32 25, %s252
        %p254 = scmp.lt.s32.totalorder %s253, 13
        %s255 = scalar_select %p254, %s253, 13
        %s256 = smul.u32 8, %s255
        %p257 = scmp.lt.s32.totalorder %s252, 24
        %s258 = scalar_select %p257, %s252, 24
        %s259 = smul.addr %s258, 8
        %s260 = scalar_lea.vmem %s0, %s259
        %p261 = pneg %p39
        %p262 = pneg %p36
        %p263 = pneg %p60
        %p264 = pneg %p57
        %p265 = pneg %p81
        %p266 = pneg %p78
        %p267 = pneg %p102
        %p268 = pneg %p99
        %p269 = pneg %p123
        %p270 = pneg %p120
        %p271 = pneg %p144
        %p272 = pneg %p141
        %p273 = pneg %p165
        %p274 = pneg %p162
        %p275 = pneg %p191
        %p276 = pneg %p188
        %s277 = sand.u32 %s178, 1
        %s278 = sand.u32 %s178, 1
        %s279 = smul.addr %s278, 104
        %s280 = scalar_lea.vmem [#allocation2], %s279
        %s281 = smul.u32 13, %s18
        %s282 = ssub.s32 25, %s281
        %p283 = scmp.lt.s32.totalorder %s282, 13
        %s284 = scalar_select %p283, %s282, 13
        %s285 = smul.u32 8, %s284
        %p286 = scmp.lt.s32.totalorder %s281, 24
        %s287 = scalar_select %p286, %s281, 24
        %s288 = smul.addr %s287, 8
        %s289 = scalar_lea.vmem %s0, %s288
        %s290 = smul.u32 13, %s18
        %s291 = ssub.s32 25, %s290
        %p292 = scmp.lt.s32.totalorder %s291, 13
        %s293 = scalar_select %p292, %s291, 13
        %s294 = smul.u32 8, %s293
        %s295 = smul.u32 13, %s18
        %s296 = ssub.s32 25, %s295
        %p297 = scmp.lt.s32.totalorder %s296, 13
        %s298 = scalar_select %p297, %s296, 13
        %s299 = smul.u32 8, %s298
        %v300 = vld [vmem:[%s289] sm:$0xff]
        %v301 = vld [vmem:[%s289 + $0x8] sm:$0xff]
        %v302 = vld [vmem:[%s289 + $0x10] sm:$0xff]
        %v303 = vld [vmem:[%s289 + $0x18] sm:$0xff]
        %v304 = vld [vmem:[%s289 + $0x20] sm:$0xff]
        %v305 = vld [vmem:[%s289 + $0x28] sm:$0xff]
        %v306 = vld [vmem:[%s289 + $0x30] sm:$0xff]
        %v307 = vld [vmem:[%s289 + $0x38] sm:$0xff]
        %v308 = vld [vmem:[%s289 + $0x40] sm:$0xff]
        %v309 = vld [vmem:[%s289 + $0x48] sm:$0xff]
        %v310 = vld [vmem:[%s289 + $0x50] sm:$0xff]
        %v311 = vld [vmem:[%s289 + $0x58] sm:$0xff]
        %v312 = vld [vmem:[%s289 + $0x60] sm:$0xff]
        %v313 = vld [vmem:[%s1] sm:$0xff]
        %v314 = vld [vmem:[%s1 + $0x8] sm:$0xff]
        %v315 = vld [vmem:[%s1 + $0x10] sm:$0xff]
        %v316 = vld [vmem:[%s1 + $0x18] sm:$0xff]
        %v317 = vld [vmem:[%s2] sm:$0x1]
        %v319 = vperm.slane %v317, 0
        %vm321 = vcmask 261120
        %v323 = vsel %vm321, %v300, 0
        %v326 = vsel %vm321, %v301, 0
        %v329 = vsel %vm321, %v302, 0
        %v332 = vsel %vm321, %v303, 0
        %v335 = vsel %vm321, %v304, 0
        %v338 = vsel %vm321, %v305, 0
        %v341 = vsel %vm321, %v306, 0
        %v344 = vsel %vm321, %v307, 0
        %v347 = vsel %vm321, %v308, 0
        %v350 = vsel %vm321, %v309, 0
        %v353 = vsel %vm321, %v310, 0
        %v356 = vsel %vm321, %v311, 0
        %v359 = vsel %vm321, %v312, 0
        %361 = vmatpush.msra.mxu0 0.0
        %362 = vmatpush.msra.mxu0 0.0
        %363 = vmatpush.msra.mxu0 0.0
        %364 = vmatpush.msra.mxu0 0.0
        %365 = vmatpush.msra.mxu0 0.0
        %366 = vmatpush.msra.mxu0 0.0
        %367 = vmatpush.msra.mxu0 0.0
        %368 = vmatpush.msra.mxu0 0.0
        %369 = vmatpush.msra.mxu0 0.0
        %370 = vmatpush.msra.mxu0 0.0
        %371 = vmatpush.msra.mxu0 0.0
        %372 = vmatpush.msra.mxu0 0.0
        %373 = vmatpush.msra.mxu0 %v316
        %374 = vmatpush.msra.mxu0 %v315
        %375 = vmatpush.msra.mxu0 %v314
        %376 = vmatpush.msra.mxu0 %v313
        %377 = vmatmul.f32.gmra.mxu0 %v323
        %v378 = vpop.f32.mrf.mxu0
        %v379 = vadd.f32 %v319, %v378
        %380 = vmatmul.f32.gmra.mxu0 %v326
        %v381 = vpop.f32.mrf.mxu0
        %v382 = vadd.f32 %v319, %v381
        %383 = vmatmul.f32.gmra.mxu0 %v329
        %v384 = vpop.f32.mrf.mxu0
        %v385 = vadd.f32 %v319, %v384
        %386 = vmatmul.f32.gmra.mxu0 %v332
        %v387 = vpop.f32.mrf.mxu0
        %v388 = vadd.f32 %v319, %v387
        %389 = vmatmul.f32.gmra.mxu0 %v335
        %v390 = vpop.f32.mrf.mxu0
        %v391 = vadd.f32 %v319, %v390
        %392 = vmatmul.f32.gmra.mxu0 %v338
        %v393 = vpop.f32.mrf.mxu0
        %v394 = vadd.f32 %v319, %v393
        %395 = vmatmul.f32.gmra.mxu0 %v341
        %v396 = vpop.f32.mrf.mxu0
        %v397 = vadd.f32 %v319, %v396
        %398 = vmatmul.f32.gmra.mxu0 %v344
        %v399 = vpop.f32.mrf.mxu0
        %v400 = vadd.f32 %v319, %v399
        %401 = vmatmul.f32.gmra.mxu0 %v347
        %v402 = vpop.f32.mrf.mxu0
        %v403 = vadd.f32 %v319, %v402
        %404 = vmatmul.f32.gmra.mxu0 %v350
        %v405 = vpop.f32.mrf.mxu0
        %v406 = vadd.f32 %v319, %v405
        %407 = vmatmul.f32.gmra.mxu0 %v353
        %v408 = vpop.f32.mrf.mxu0
        %v409 = vadd.f32 %v319, %v408
        %410 = vmatmul.f32.gmra.mxu0 %v356
        %v411 = vpop.f32.mrf.mxu0
        %v412 = vadd.f32 %v319, %v411
        %413 = vmatmul.f32.gmra.mxu0 %v359
        %v414 = vpop.f32.mrf.mxu0
        %v415 = vadd.f32 %v319, %v414
        %416 = vdwg.mxu0
        %v417 = vmax.f32 %v379, 0.0
        %v418 = vmax.f32 %v382, 0.0
        %v419 = vmax.f32 %v385, 0.0
        %v420 = vmax.f32 %v388, 0.0
        %v421 = vmax.f32 %v391, 0.0
        %v422 = vmax.f32 %v394, 0.0
        %v423 = vmax.f32 %v397, 0.0
        %v424 = vmax.f32 %v400, 0.0
        %v425 = vmax.f32 %v403, 0.0
        %v426 = vmax.f32 %v406, 0.0
        %v427 = vmax.f32 %v409, 0.0
        %v428 = vmax.f32 %v412, 0.0
        %v429 = vmax.f32 %v415, 0.0
        %v430 = vld [vmem:[%s3] sm:$0xff]
        %v431 = vld [vmem:[%s3 + $0x8] sm:$0xff]
        %v432 = vld [vmem:[%s4] sm:$0x1]
        %v434 = vperm.slane %v432, 0
        %vm436 = vcmask 130048
        %v438 = vsel %vm436, %v417, 0
        %v441 = vsel %vm436, %v418, 0
        %v444 = vsel %vm436, %v419, 0
        %v447 = vsel %vm436, %v420, 0
        %v450 = vsel %vm436, %v421, 0
        %v453 = vsel %vm436, %v422, 0
        %v456 = vsel %vm436, %v423, 0
        %v459 = vsel %vm436, %v424, 0
        %v462 = vsel %vm436, %v425, 0
        %v465 = vsel %vm436, %v426, 0
        %v468 = vsel %vm436, %v427, 0
        %v471 = vsel %vm436, %v428, 0
        %v474 = vsel %vm436, %v429, 0
        %476 = vmatpush.msra.mxu0 0.0
        %477 = vmatpush.msra.mxu0 0.0
        %478 = vmatpush.msra.mxu0 0.0
        %479 = vmatpush.msra.mxu0 0.0
        %480 = vmatpush.msra.mxu0 0.0
        %481 = vmatpush.msra.mxu0 0.0
        %482 = vmatpush.msra.mxu0 0.0
        %483 = vmatpush.msra.mxu0 0.0
        %484 = vmatpush.msra.mxu0 0.0
        %485 = vmatpush.msra.mxu0 0.0
        %486 = vmatpush.msra.mxu0 0.0
        %487 = vmatpush.msra.mxu0 0.0
        %488 = vmatpush.msra.mxu0 0.0
        %489 = vmatpush.msra.mxu0 0.0
        %490 = vmatpush.msra.mxu0 %v431
        %491 = vmatpush.msra.mxu0 %v430
        %492 = vmatmul.f32.gmra.mxu0 %v438
        %v493 = vpop.f32.mrf.mxu0
        %v494 = vadd.f32 %v434, %v493
        %495 = vmatmul.f32.gmra.mxu0 %v441
        %v496 = vpop.f32.mrf.mxu0
        %v497 = vadd.f32 %v434, %v496
        %498 = vmatmul.f32.gmra.mxu0 %v444
        %v499 = vpop.f32.mrf.mxu0
        %v500 = vadd.f32 %v434, %v499
        %501 = vmatmul.f32.gmra.mxu0 %v447
        %v502 = vpop.f32.mrf.mxu0
        %v503 = vadd.f32 %v434, %v502
        %504 = vmatmul.f32.gmra.mxu0 %v450
        %v505 = vpop.f32.mrf.mxu0
        %v506 = vadd.f32 %v434, %v505
        %507 = vmatmul.f32.gmra.mxu0 %v453
        %v508 = vpop.f32.mrf.mxu0
        %v509 = vadd.f32 %v434, %v508
        %510 = vmatmul.f32.gmra.mxu0 %v456
        %v511 = vpop.f32.mrf.mxu0
        %v512 = vadd.f32 %v434, %v511
        %513 = vmatmul.f32.gmra.mxu0 %v459
        %v514 = vpop.f32.mrf.mxu0
        %v515 = vadd.f32 %v434, %v514
        %516 = vmatmul.f32.gmra.mxu0 %v462
        %v517 = vpop.f32.mrf.mxu0
        %v518 = vadd.f32 %v434, %v517
        %519 = vmatmul.f32.gmra.mxu0 %v465
        %v520 = vpop.f32.mrf.mxu0
        %v521 = vadd.f32 %v434, %v520
        %522 = vmatmul.f32.gmra.mxu0 %v468
        %v523 = vpop.f32.mrf.mxu0
        %v524 = vadd.f32 %v434, %v523
        %525 = vmatmul.f32.gmra.mxu0 %v471
        %v526 = vpop.f32.mrf.mxu0
        %v527 = vadd.f32 %v434, %v526
        %528 = vmatmul.f32.gmra.mxu0 %v474
        %v529 = vpop.f32.mrf.mxu0
        %v530 = vadd.f32 %v434, %v529
        %531 = vdwg.mxu0
        %v532 = vmax.f32 %v494, 0.0
        %v533 = vmax.f32 %v497, 0.0
        %v534 = vmax.f32 %v500, 0.0
        %v535 = vmax.f32 %v503, 0.0
        %v536 = vmax.f32 %v506, 0.0
        %v537 = vmax.f32 %v509, 0.0
        %v538 = vmax.f32 %v512, 0.0
        %v539 = vmax.f32 %v515, 0.0
        %v540 = vmax.f32 %v518, 0.0
        %v541 = vmax.f32 %v521, 0.0
        %v542 = vmax.f32 %v524, 0.0
        %v543 = vmax.f32 %v527, 0.0
        %v544 = vmax.f32 %v530, 0.0
        %v545 = vld [vmem:[%s5] sm:$0xff]
        %v546 = vld [vmem:[%s5 + $0x8] sm:$0xff]
        %v547 = vld [vmem:[%s6] sm:$0x1]
        %v549 = vperm.slane %v547, 0
        %v552 = vsel %vm436, %v532, 0
        %v555 = vsel %vm436, %v533, 0
        %v558 = vsel %vm436, %v534, 0
        %v561 = vsel %vm436, %v535, 0
        %v564 = vsel %vm436, %v536, 0
        %v567 = vsel %vm436, %v537, 0
        %v570 = vsel %vm436, %v538, 0
        %v573 = vsel %vm436, %v539, 0
        %v576 = vsel %vm436, %v540, 0
        %v579 = vsel %vm436, %v541, 0
        %v582 = vsel %vm436, %v542, 0
        %v585 = vsel %vm436, %v543, 0
        %v588 = vsel %vm436, %v544, 0
        %590 = vmatpush.msra.mxu0 0.0
        %591 = vmatpush.msra.mxu0 0.0
        %592 = vmatpush.msra.mxu0 0.0
        %593 = vmatpush.msra.mxu0 0.0
        %594 = vmatpush.msra.mxu0 0.0
        %595 = vmatpush.msra.mxu0 0.0
        %596 = vmatpush.msra.mxu0 0.0
        %597 = vmatpush.msra.mxu0 0.0
        %598 = vmatpush.msra.mxu0 0.0
        %599 = vmatpush.msra.mxu0 0.0
        %600 = vmatpush.msra.mxu0 0.0
        %601 = vmatpush.msra.mxu0 0.0
        %602 = vmatpush.msra.mxu0 0.0
        %603 = vmatpush.msra.mxu0 0.0
        %604 = vmatpush.msra.mxu0 %v546
        %605 = vmatpush.msra.mxu0 %v545
        %606 = vmatmul.f32.gmra.mxu0 %v552
        %v607 = vpop.f32.mrf.mxu0
        %v608 = vadd.f32 %v549, %v607
        %609 = vmatmul.f32.gmra.mxu0 %v555
        %v610 = vpop.f32.mrf.mxu0
        %v611 = vadd.f32 %v549, %v610
        %612 = vmatmul.f32.gmra.mxu0 %v558
        %v613 = vpop.f32.mrf.mxu0
        %v614 = vadd.f32 %v549, %v613
        %615 = vmatmul.f32.gmra.mxu0 %v561
        %v616 = vpop.f32.mrf.mxu0
        %v617 = vadd.f32 %v549, %v616
        %618 = vmatmul.f32.gmra.mxu0 %v564
        %v619 = vpop.f32.mrf.mxu0
        %v620 = vadd.f32 %v549, %v619
        %621 = vmatmul.f32.gmra.mxu0 %v567
        %v622 = vpop.f32.mrf.mxu0
        %v623 = vadd.f32 %v549, %v622
        %624 = vmatmul.f32.gmra.mxu0 %v570
        %v625 = vpop.f32.mrf.mxu0
        %v626 = vadd.f32 %v549, %v625
        %627 = vmatmul.f32.gmra.mxu0 %v573
        %v628 = vpop.f32.mrf.mxu0
        %v629 = vadd.f32 %v549, %v628
        %630 = vmatmul.f32.gmra.mxu0 %v576
        %v631 = vpop.f32.mrf.mxu0
        %v632 = vadd.f32 %v549, %v631
        %633 = vmatmul.f32.gmra.mxu0 %v579
        %v634 = vpop.f32.mrf.mxu0
        %v635 = vadd.f32 %v549, %v634
        %636 = vmatmul.f32.gmra.mxu0 %v582
        %v637 = vpop.f32.mrf.mxu0
        %v638 = vadd.f32 %v549, %v637
        %639 = vmatmul.f32.gmra.mxu0 %v585
        %v640 = vpop.f32.mrf.mxu0
        %v641 = vadd.f32 %v549, %v640
        %642 = vmatmul.f32.gmra.mxu0 %v588
        %v643 = vpop.f32.mrf.mxu0
        %v644 = vadd.f32 %v549, %v643
        %645 = vdwg.mxu0
        %646 = vst.msk [vmem:[%s280] sm:$0xff] %vm321, %v608
        %647 = vst.msk [vmem:[%s280 + $0x8] sm:$0xff] %vm321, %v611
        %648 = vst.msk [vmem:[%s280 + $0x10] sm:$0xff] %vm321, %v614
        %649 = vst.msk [vmem:[%s280 + $0x18] sm:$0xff] %vm321, %v617
        %650 = vst.msk [vmem:[%s280 + $0x20] sm:$0xff] %vm321, %v620
        %651 = vst.msk [vmem:[%s280 + $0x28] sm:$0xff] %vm321, %v623
        %652 = vst.msk [vmem:[%s280 + $0x30] sm:$0xff] %vm321, %v626
        %653 = vst.msk [vmem:[%s280 + $0x38] sm:$0xff] %vm321, %v629
        %654 = vst.msk [vmem:[%s280 + $0x40] sm:$0xff] %vm321, %v632
        %655 = vst.msk [vmem:[%s280 + $0x48] sm:$0xff] %vm321, %v635
        %656 = vst.msk [vmem:[%s280 + $0x50] sm:$0xff] %vm321, %v638
        %657 = vst.msk [vmem:[%s280 + $0x58] sm:$0xff] %vm321, %v641
        %658 = vst.msk [vmem:[%s280 + $0x60] sm:$0xff] %vm321, %v644
        %s659 = sand.u32 %s178, 1
        %s660 = sand.u32 %s178, 1
        %s661 = smul.addr %s660, 104
        %s662 = scalar_lea.vmem [#allocation2], %s661
        // Predicated region
        $region49: #{tpu_custom_call.1} parent=47 // pred_check
          %p663 = pneg %p188
        $region50: #{tpu_custom_call.1} parent=47 // pred_check_branch
          %665 = sbr.rel (%p663) target = $region52
        $region51: #{tpu_custom_call.1} parent=47 // pred_region
          %s666 = smul.u32 13, %s18
          %s667 = ssub.s32 25, %s666
          %p668 = scmp.lt.s32.totalorder %s667, 13
          %s669 = scalar_select %p668, %s667, 13
          %s670 = smul.u32 8, %s669
          %p671 = scmp.ne.s32.totalorder 0, %s670
          %s672 = smul.addr %s666, 8
          %s673 = scalar_lea.vmem %s7, %s672
          // Predicated region
          $region53: #{tpu_custom_call.1} parent=51 // pred_check
            %p674 = pneg %p671
          $region54: #{tpu_custom_call.1} parent=51 // pred_check_branch
            %676 = sbr.rel (%p674) target = $region56
          $region55: #{tpu_custom_call.1} parent=51 // pred_region
            // Predicated region
            $region57: #{tpu_custom_call.1} parent=55 // pred_check
              _
            $region58: #{tpu_custom_call.1} parent=55 // pred_check_branch
              %678 = sbr.rel (0) target = $region60
            $region59: #{tpu_custom_call.1} parent=55 // pred_region
              // Predicated region
              $region79: #{tpu_custom_call.1} parent=59 // pred_check
                _
              $region80: #{tpu_custom_call.1} parent=59 // pred_check_branch
                %753 = sbr.rel (0) target = $region82
              $region81: #{tpu_custom_call.1} parent=59 // pred_region
                %s754 = sdiv.u32.pop %s669, 13
                %s755 = srem.u32.pop %s669, 13
                // While loop
                $region83: #{tpu_custom_call.1} parent=81 // loop_pre_header
                  _
                $region84: #{tpu_custom_call.1} parent=81 // loop_header
                  %s757 = sphi 0, %s759
                  %p758 = scmp.ge.s32.totalorder %s757, %s754
                  %s762 = sphi 0, %s793
                  %s763 = sphi %s662, %s796
                  %s764 = sphi %s673, %s797
                $region85: #{tpu_custom_call.1} parent=81 // loop_header_branch
                  %761 = sbr.rel (%p758) target = $region89
                $region86: #{tpu_custom_call.1} parent=81 // loop_body
                  %v765 = vld [vmem:[%s763] sm:$0xff]
                  %766 = vst [vmem:[%s764] sm:$0xff] %v765
                  %v767 = vld [vmem:[%s763 + $0x8] sm:$0xff]
                  %768 = vst [vmem:[%s764 + $0x8] sm:$0xff] %v767
                  %v769 = vld [vmem:[%s763 + $0x10] sm:$0xff]
                  %770 = vst [vmem:[%s764 + $0x10] sm:$0xff] %v769
                  %v771 = vld [vmem:[%s763 + $0x18] sm:$0xff]
                  %772 = vst [vmem:[%s764 + $0x18] sm:$0xff] %v771
                  %v773 = vld [vmem:[%s763 + $0x20] sm:$0xff]
                  %774 = vst [vmem:[%s764 + $0x20] sm:$0xff] %v773
                  %v775 = vld [vmem:[%s763 + $0x28] sm:$0xff]
                  %776 = vst [vmem:[%s764 + $0x28] sm:$0xff] %v775
                  %v777 = vld [vmem:[%s763 + $0x30] sm:$0xff]
                  %778 = vst [vmem:[%s764 + $0x30] sm:$0xff] %v777
                  %v779 = vld [vmem:[%s763 + $0x38] sm:$0xff]
                  %780 = vst [vmem:[%s764 + $0x38] sm:$0xff] %v779
                  %v781 = vld [vmem:[%s763 + $0x40] sm:$0xff]
                  %782 = vst [vmem:[%s764 + $0x40] sm:$0xff] %v781
                  %v783 = vld [vmem:[%s763 + $0x48] sm:$0xff]
                  %784 = vst [vmem:[%s764 + $0x48] sm:$0xff] %v783
                  %v785 = vld [vmem:[%s763 + $0x50] sm:$0xff]
                  %786 = vst [vmem:[%s764 + $0x50] sm:$0xff] %v785
                  %v787 = vld [vmem:[%s763 + $0x58] sm:$0xff]
                  %788 = vst [vmem:[%s764 + $0x58] sm:$0xff] %v787
                  %v789 = vld [vmem:[%s763 + $0x60] sm:$0xff]
                  %790 = vst [vmem:[%s764 + $0x60] sm:$0xff] %v789
                  %s791 = sadd.s32 1, %s762
                  %p792 = scmp.ge.s32.totalorder %s791, %s754
                  %s793 = scalar_select %p792, 0, %s791
                  %s794 = smul.u32 %s793, 104
                  %s795 = smul.u32 %s793, 104
                  %s796 = scalar_lea.vmem %s662, %s794 [#allocation2]
                  %s797 = scalar_lea.vmem %s673, %s795
                $region87: #{tpu_custom_call.1} parent=81 // loop_footer
                  %s759 = sadd.s32 %s757, 1
                $region88: #{tpu_custom_call.1} parent=81 // loop_footer_branch
                  %756 = sbr.rel target = $region84
                $region89: #{tpu_custom_call.1} parent=81 // loop_exit
                  _
                %s798 = sdiv.u32.pop %s669, 13
                %s799 = srem.u32.pop %s669, 13
                %s800 = smul.u32 %s798, 13
                %s801 = smul.u32 8, %s800
                %s802 = scalar_lea.vmem %s662, %s801 [#allocation2]
                %s803 = smul.u32 8, %s800
                %s804 = scalar_lea.vmem %s673, %s803
                // While loop
                $region90: #{tpu_custom_call.1} parent=81 // loop_pre_header
                  _
                $region91: #{tpu_custom_call.1} parent=81 // loop_header
                  %s806 = sphi 0, %s808
                  %p807 = scmp.ge.s32.totalorder %s806, %s799
                  %s811 = sphi 0, %s818
                  %s812 = sphi %s802, %s821
                  %s813 = sphi %s804, %s822
                $region92: #{tpu_custom_call.1} parent=81 // loop_header_branch
                  %810 = sbr.rel (%p807) target = $region96
                $region93: #{tpu_custom_call.1} parent=81 // loop_body
                  %v814 = vld [vmem:[%s812] sm:$0xff]
                  %815 = vst [vmem:[%s813] sm:$0xff] %v814
                  %s816 = sadd.s32 1, %s811
                  %p817 = scmp.ge.s32.totalorder %s816, %s799
                  %s818 = scalar_select %p817, 0, %s816
                  %s819 = smul.u32 %s818, 8
                  %s820 = smul.u32 %s818, 8
                  %s821 = scalar_lea.vmem %s802, %s819 [#allocation2]
                  %s822 = scalar_lea.vmem %s804, %s820
                $region94: #{tpu_custom_call.1} parent=81 // loop_footer
                  %s808 = sadd.s32 %s806, 1
                $region95: #{tpu_custom_call.1} parent=81 // loop_footer_branch
                  %805 = sbr.rel target = $region91
                $region96: #{tpu_custom_call.1} parent=81 // loop_exit
                  _
              $region82: #{tpu_custom_call.1} parent=59 // pred_fallthru
                _
              // Predicated region
              $region97: #{tpu_custom_call.1} parent=59 // pred_check
                _
              $region98: #{tpu_custom_call.1} parent=59 // pred_check_branch
                %824 = sbr.rel target = $region100
              $region99: #{tpu_custom_call.1} parent=59 // pred_region
                _
              $region100: #{tpu_custom_call.1} parent=59 // pred_fallthru
                _
            $region60: #{tpu_custom_call.1} parent=55 // pred_fallthru
              _
            // Predicated region
            $region61: #{tpu_custom_call.1} parent=55 // pred_check
              _
            $region62: #{tpu_custom_call.1} parent=55 // pred_check_branch
              %680 = sbr.rel target = $region64
            $region63: #{tpu_custom_call.1} parent=55 // pred_region
              %s682 = ssub.s32 256, 1
              %s683 = sdiv.u32.pop %s669, 13
              %s684 = srem.u32.pop %s669, 13
              // While loop
              $region65: #{tpu_custom_call.1} parent=63 // loop_pre_header
                _
              $region66: #{tpu_custom_call.1} parent=63 // loop_header
                %s686 = sphi 0, %s688
                %p687 = scmp.ge.s32.totalorder %s686, %s683
                %s691 = sphi 0, %s722
                %s692 = sphi %s662, %s725
                %s693 = sphi %s673, %s726
              $region67: #{tpu_custom_call.1} parent=63 // loop_header_branch
                %690 = sbr.rel (%p687) target = $region71
              $region68: #{tpu_custom_call.1} parent=63 // loop_body
                %v694 = vld [vmem:[%s692] sm:%s682]
                %695 = vst [vmem:[%s693] sm:%s682] %v694
                %v696 = vld [vmem:[%s692 + $0x8] sm:%s682]
                %697 = vst [vmem:[%s693 + $0x8] sm:%s682] %v696
                %v698 = vld [vmem:[%s692 + $0x10] sm:%s682]
                %699 = vst [vmem:[%s693 + $0x10] sm:%s682] %v698
                %v700 = vld [vmem:[%s692 + $0x18] sm:%s682]
                %701 = vst [vmem:[%s693 + $0x18] sm:%s682] %v700
                %v702 = vld [vmem:[%s692 + $0x20] sm:%s682]
                %703 = vst [vmem:[%s693 + $0x20] sm:%s682] %v702
                %v704 = vld [vmem:[%s692 + $0x28] sm:%s682]
                %705 = vst [vmem:[%s693 + $0x28] sm:%s682] %v704
                %v706 = vld [vmem:[%s692 + $0x30] sm:%s682]
                %707 = vst [vmem:[%s693 + $0x30] sm:%s682] %v706
                %v708 = vld [vmem:[%s692 + $0x38] sm:%s682]
                %709 = vst [vmem:[%s693 + $0x38] sm:%s682] %v708
                %v710 = vld [vmem:[%s692 + $0x40] sm:%s682]
                %711 = vst [vmem:[%s693 + $0x40] sm:%s682] %v710
                %v712 = vld [vmem:[%s692 + $0x48] sm:%s682]
                %713 = vst [vmem:[%s693 + $0x48] sm:%s682] %v712
                %v714 = vld [vmem:[%s692 + $0x50] sm:%s682]
                %715 = vst [vmem:[%s693 + $0x50] sm:%s682] %v714
                %v716 = vld [vmem:[%s692 + $0x58] sm:%s682]
                %717 = vst [vmem:[%s693 + $0x58] sm:%s682] %v716
                %v718 = vld [vmem:[%s692 + $0x60] sm:%s682]
                %719 = vst [vmem:[%s693 + $0x60] sm:%s682] %v718
                %s720 = sadd.s32 1, %s691
                %p721 = scmp.ge.s32.totalorder %s720, %s683
                %s722 = scalar_select %p721, 0, %s720
                %s723 = smul.u32 %s722, 104
                %s724 = smul.u32 %s722, 104
                %s725 = scalar_lea.vmem %s662, %s723 [#allocation2]
                %s726 = scalar_lea.vmem %s673, %s724
              $region69: #{tpu_custom_call.1} parent=63 // loop_footer
                %s688 = sadd.s32 %s686, 1
              $region70: #{tpu_custom_call.1} parent=63 // loop_footer_branch
                %685 = sbr.rel target = $region66
              $region71: #{tpu_custom_call.1} parent=63 // loop_exit
                _
              %s727 = sdiv.u32.pop %s669, 13
              %s728 = srem.u32.pop %s669, 13
              %s729 = smul.u32 %s727, 13
              %s730 = smul.u32 8, %s729
              %s731 = scalar_lea.vmem %s662, %s730 [#allocation2]
              %s732 = smul.u32 8, %s729
              %s733 = scalar_lea.vmem %s673, %s732
              // While loop
              $region72: #{tpu_custom_call.1} parent=63 // loop_pre_header
                _
              $region73: #{tpu_custom_call.1} parent=63 // loop_header
                %s735 = sphi 0, %s737
                %p736 = scmp.ge.s32.totalorder %s735, %s728
                %s740 = sphi 0, %s747
                %s741 = sphi %s731, %s750
                %s742 = sphi %s733, %s751
              $region74: #{tpu_custom_call.1} parent=63 // loop_header_branch
                %739 = sbr.rel (%p736) target = $region78
              $region75: #{tpu_custom_call.1} parent=63 // loop_body
                %v743 = vld [vmem:[%s741] sm:%s682]
                %744 = vst [vmem:[%s742] sm:%s682] %v743
                %s745 = sadd.s32 1, %s740
                %p746 = scmp.ge.s32.totalorder %s745, %s728
                %s747 = scalar_select %p746, 0, %s745
                %s748 = smul.u32 %s747, 8
                %s749 = smul.u32 %s747, 8
                %s750 = scalar_lea.vmem %s731, %s748 [#allocation2]
                %s751 = scalar_lea.vmem %s733, %s749
              $region76: #{tpu_custom_call.1} parent=63 // loop_footer
                %s737 = sadd.s32 %s735, 1
              $region77: #{tpu_custom_call.1} parent=63 // loop_footer_branch
                %734 = sbr.rel target = $region73
              $region78: #{tpu_custom_call.1} parent=63 // loop_exit
                _
            $region64: #{tpu_custom_call.1} parent=55 // pred_fallthru
              _
          $region56: #{tpu_custom_call.1} parent=51 // pred_fallthru
            _
          %825 = vnop
        $region52: #{tpu_custom_call.1} parent=47 // pred_fallthru
          _
      $region48: #{tpu_custom_call.1} parent=5 // pred_fallthru
        _
      %p826 = scmp.le.s32.totalorder 2, %s13
      // Predicated region
      $region101: #{tpu_custom_call.1} parent=5 // pred_check
        %p827 = pneg %p826
      $region102: #{tpu_custom_call.1} parent=5 // pred_check_branch
        %829 = sbr.rel (%p827) target = $region104
      $region103: #{tpu_custom_call.1} parent=5 // pred_region
        %s830 = ssub.s32 %s13, 2
        // Predicated region
        $region105: #{tpu_custom_call.1} parent=103 // pred_check
          %p831 = pneg %p194
        $region106: #{tpu_custom_call.1} parent=103 // pred_check_branch
          %833 = sbr.rel (%p831) target = $region108
        $region107: #{tpu_custom_call.1} parent=103 // pred_region
          %s834 = sand.u32 %s179, 1
          %s835 = sand.u32 %s179, 1
          %s836 = smul.addr %s835, 104
          %s837 = scalar_lea.vmem [#allocation2], %s836
        $region108: #{tpu_custom_call.1} parent=103 // pred_fallthru
          _
      $region104: #{tpu_custom_call.1} parent=5 // pred_fallthru
        _
    $region6: #{tpu_custom_call.1} parent=1 // loop_footer
      %s17 = sadd.s32 1, %s13
    $region7: #{tpu_custom_call.1} parent=1 // loop_footer_branch
      %12 = sbr.rel target = $region3
    $region8: #{tpu_custom_call.1} parent=1 // loop_exit
      _

</llo_original>
